<compile_context>
chip_gen: v7x
topology: tpu7x:2x2x1
jax: 0.10.0
libtpu: 0.0.40
codegen_flags: <defaults>
</compile_context>

<pallas_src>
import math

import jax
import jax.numpy as jnp
from jax.experimental import pallas as pl
from jax.experimental.pallas import tpu as pltpu

_LANE = 128
_TILE_BYTES = 6 * 1024 * 1024      # per-tile cap: 4 x tile (in+out, 2-buf) = 24 MiB
_MAX_FLAT_LANES = 8192             # lane width cap for the flat retiled view


def _flatten_copy_kernel(x_ref, o_ref):
    # Pure copy: no VALU/XLU/EUP work, lowers to plain vld/vst around the DMAs.
    o_ref[...] = x_ref[...]


def _largest_lane_divisor(total: int, cap: int) -> int:
    """Largest multiple of 128 that divides `total` and is <= cap.
    Requires total % 128 == 0."""
    m = total // _LANE
    for d in range(min(m, cap // _LANE), 0, -1):
        if m % d == 0:
            return d * _LANE
    return _LANE


def flatten_reference(x):
    """Metadata-only reshape — what production code should actually use."""
    return jnp.reshape(x, (x.shape[0], -1))


def flatten_pallas(x):
    """FlattenLayer.forward as a Pallas kernel boundary (identity copy)."""
    n = x.shape[0]
    f = math.prod(x.shape[1:]) if x.ndim > 1 else 1
    dtype = jnp.dtype(x.dtype)
    itemsize = dtype.itemsize
    total = n * f

    if total == 0:
        return jnp.reshape(x, (n, f))

    # dtype-aware sublane alignment: 8 (f32), 16 (bf16/f16), 32 (int8/fp8).
    sublane = max(8, 32 // itemsize)

    # ---- choose a 2-D view (R, C) of the flat buffer (metadata-only) -------
    if f % _LANE == 0 or total % _LANE != 0:
        view_r, view_c = n, f
    else:
        # f is lane-misaligned but the flat buffer is not: retile so every
        # block is lane-dense (unmasked vst) regardless of the input shape.
        view_c = _largest_lane_divisor(total, _MAX_FLAT_LANES)
        view_r = total // view_c
    x2 = jnp.reshape(x, (view_r, view_c))  # metadata-only

    # ---- lane (last-dim) block ---------------------------------------------
    # Full rows when modest -> one contiguous single-stride DMA per tile row.
    row_bytes_cap = min(1024 * 1024, _TILE_BYTES // sublane)
    if view_c * itemsize <= row_bytes_cap:
        block_c = view_c
    else:
        block_c = max(_LANE, (row_bytes_cap // (itemsize * _LANE)) * _LANE)

    # ---- sublane (row) block -----------------------------------------------
    rows_fit = max(1, _TILE_BYTES // (block_c * itemsize))
    block_r = (min(view_r, rows_fit) // sublane) * sublane
    if block_r == 0:
        block_r = view_r           # full extent (< one sublane group) is legal

    grid_r = pl.cdiv(view_r, block_r)
    grid_c = pl.cdiv(view_c, block_c)

    # ---- grid / specs (partial boundary blocks are masked by Pallas) -------
    if grid_c == 1:
        grid = (grid_r,)
        in_spec = pl.BlockSpec((block_r, view_c), lambda i: (i, 0))
        out_spec = pl.BlockSpec((block_r, view_c), lambda i: (i, 0))
    else:
        grid = (grid_r, grid_c)
        in_spec = pl.BlockSpec((block_r, block_c), lambda i, j: (i, j))
        out_spec = pl.BlockSpec((block_r, block_c), lambda i, j: (i, j))

    out2 = pl.pallas_call(
        _flatten_copy_kernel,
        out_shape=jax.ShapeDtypeStruct((view_r, view_c), dtype),
        grid=grid,
        in_specs=[in_spec],
        out_specs=out_spec,
        # Exact identity copy, identical in/out index maps: let XLA reuse the
        # input buffer (halves peak HBM when the caller donates the input).
        input_output_aliases={0: 0},
        compiler_params=pltpu.CompilerParams(
            # Pure copy, no reduction: every axis parallel (shards the grid
            # across v7x's two TensorCores; no-op on v5e/v6e).
            dimension_semantics=("parallel",) * len(grid),
            vmem_limit_bytes=32 * 1024 * 1024,
        ),
        cost_estimate=pl.CostEstimate(
            flops=0, transcendentals=0, bytes_accessed=2 * total * itemsize
        ),
    )(x2)

    return jnp.reshape(out2, (n, f))  # metadata-only


if __name__ == "__main__":
    key = jax.random.PRNGKey(0)

    # Primary case from the module spec: NCHW, f % 128 == 0.
    x = jax.random.normal(key, (2, 4, 16, 16), dtype=jnp.float32)
    y = jax.block_until_ready(flatten_pallas(x))
    assert y.shape == (2, 4 * 16 * 16), y.shape
    assert bool(jnp.array_equal(y, flatten_reference(x)))

    # Lane-misaligned f but 128-divisible total -> flat retiled view path.
    x2 = jax.random.normal(key, (4, 3, 8, 8), dtype=jnp.float32)
    y2 = jax.block_until_ready(flatten_pallas(x2))
    assert y2.shape == (4, 192), y2.shape
    assert bool(jnp.array_equal(y2, flatten_reference(x2)))

    # Packed dtype (bf16) -> dtype-aware sublane alignment path.
    x3 = jax.random.normal(key, (2, 4, 16, 16), dtype=jnp.bfloat16)
    y3 = jax.block_until_ready(flatten_pallas(x3))
    assert y3.shape == (2, 1024), y3.shape
    assert bool(jnp.array_equal(y3, flatten_reference(x3)))

    print("KERNEL_OK")
</pallas_src>

<mosaic_0001>
module attributes {stable_mosaic.version = 11 : i64} {
  func.func @_flatten_copy_kernel(%arg0: i32, %arg1: memref<2x1024xf32, #tpu.memory_space<vmem>>, %arg2: memref<2x1024xf32, #tpu.memory_space<vmem>>) attributes {dimension_semantics = [#tpu.dimension_semantics<parallel>], iteration_bounds = array<i64: 1>, scalar_prefetch = 0 : i64, scratch_operands = 0 : i64, tpu.core_type = #tpu.core_type<tc>, window_params = [{transform_indices = @transform_0, window_bounds = array<i64: 2, 1024>}, {transform_indices = @transform_1, window_bounds = array<i64: 2, 1024>}]} {
    %c0 = arith.constant 0 : index
    %c0_0 = arith.constant 0 : index
    %0 = vector.load %arg1[%c0, %c0_0] : memref<2x1024xf32, #tpu.memory_space<vmem>>, vector<2x1024xf32>
    %c0_1 = arith.constant 0 : index
    %c0_2 = arith.constant 0 : index
    %1 = vector.load %arg2[%c0_1, %c0_2] : memref<2x1024xf32, #tpu.memory_space<vmem>>, vector<2x1024xf32>
    tpu.vector_store %arg2[%c0_1, %c0_2], %0 {strides = array<i32>} : memref<2x1024xf32, #tpu.memory_space<vmem>>, vector<2x1024xf32>,
    return
  }
  func.func @transform_0(%arg0: i32) -> (i32, i32) {
    %c0_i32 = arith.constant 0 : i32
    %c0_i32_0 = arith.constant 0 : i32
    return %arg0, %c0_i32 : i32, i32
  }
  func.func @transform_1(%arg0: i32) -> (i32, i32) {
    %c0_i32 = arith.constant 0 : i32
    %c0_i32_0 = arith.constant 0 : i32
    return %arg0, %c0_i32 : i32, i32
  }
}

</mosaic_0001>

<llo_original>
// kernel: tpu_custom_call.1
$region0: #{tpu_custom_call.1}
  #allocation0 [shape = 'u32[]', space=smem, size = 0x4, offset = 0x4, fixed_abs, tag = 'smem constant byte address 0x4 - core index']
  #allocation1 [shape = 'u32[144,128]{1,0:T(1,128)}', space=vmem, size = 0x12000, scoped, tag = 'internal scratch']
  %s0 = inlined_call_operand.hbm [shape: f32[2,1024], index: 0, kind: input, shape index: {}, may-alias: {0,1}]
  %s1 = inlined_call_operand.hbm [shape: f32[2,1024], index: 1, kind: output, shape index: {}, may-alias: {0,1}]
  %s2 = sld [smem:[#allocation0]]
  $region18: #{tpu_custom_call.1} parent=0
    _
  %s4 = ssub.s32 1, %s2
  %s5 = scalar_select 0, %s4, %s2
  $region1: #{tpu_custom_call.1} parent=0
    #allocation2 [shape = 'u8[8192]{0}', space=vmem, size = 0x2000, scoped, tag = 'input window, operand 0, single buffered']
    #allocation3 [shape = 's32[1]{0}', space=sflag, size = 0x4, scoped, tag = 'scoped memory for tpu_custom_call.1']
    #allocation4 [shape = 's32[1]{0}', space=sflag, size = 0x4, scoped, tag = 'scoped memory for tpu_custom_call.1']
    #allocation5 [shape = 'u8[8192]{0}', space=vmem, size = 0x2000, scoped, tag = 'output window, operand 0, single buffered']
    %6 = vsyncpa [#allocation3], 0
    %7 = vsyncpa [#allocation4], 0
    // Predicated region
    $region2: #{tpu_custom_call.1} parent=1 // pred_check
      _
    $region3: #{tpu_custom_call.1} parent=1 // pred_check_branch
      %9 = sbr.rel (0) target = $region5
    $region4: #{tpu_custom_call.1} parent=1 // pred_region
      %s11 = ssub.s32 256, 256
      %12 = vsyncadd [#allocation3], %s11
      %s14 = sshll.u32 [#allocation2], 4
      %s15 = int_to_ptr.vmem [resolvable:$true] %s14
      %17 = dma.hbm_to_vmem [thread:$0]  %s0, 256, %s15, [#allocation3]
    $region5: #{tpu_custom_call.1} parent=1 // pred_fallthru
      _
    // Predicated region
    $region6: #{tpu_custom_call.1} parent=1 // pred_check
      _
    $region7: #{tpu_custom_call.1} parent=1 // pred_check_branch
      %19 = sbr.rel (0) target = $region9
    $region8: #{tpu_custom_call.1} parent=1 // pred_region
      %20 = dma.done [#allocation3], 256
    $region9: #{tpu_custom_call.1} parent=1 // pred_fallthru
      _
    %v21 = vld [vmem:[#allocation2] sm:$0xff]
    %v22 = vld [vmem:[#allocation2 + $0x8] sm:$0xff]
    %23 = vst [vmem:[#allocation5] sm:$0xff] %v21
    %24 = vst [vmem:[#allocation5 + $0x8] sm:$0xff] %v22
    // Predicated region
    $region10: #{tpu_custom_call.1} parent=1 // pred_check
      _
    $region11: #{tpu_custom_call.1} parent=1 // pred_check_branch
      %26 = sbr.rel (0) target = $region13
    $region12: #{tpu_custom_call.1} parent=1 // pred_region
      %s28 = ssub.s32 256, 256
      %29 = vsyncadd [#allocation4], %s28
      %s31 = sshll.u32 [#allocation5], 4
      %s32 = int_to_ptr.vmem [resolvable:$true] %s31
      %34 = dma.vmem_to_hbm [thread:$0]  %s32, 256, %s1, [#allocation4]
    $region13: #{tpu_custom_call.1} parent=1 // pred_fallthru
      _
    // Predicated region
    $region14: #{tpu_custom_call.1} parent=1 // pred_check
      _
    $region15: #{tpu_custom_call.1} parent=1 // pred_check_branch
      %36 = sbr.rel (0) target = $region17
    $region16: #{tpu_custom_call.1} parent=1 // pred_region
      %37 = dma.done [#allocation4], 256
    $region17: #{tpu_custom_call.1} parent=1 // pred_fallthru
      _
    %38 = vsyncpa [#allocation3], 1
    %39 = vsyncpa [#allocation4], 1

</llo_original>
